<compile_context>
chip_gen: v5e
topology: v5e:2x2
jax: 0.10.0
libtpu: 0.0.40
codegen_flags: <defaults>
</compile_context>

<pallas_src>
import functools

import jax
import jax.numpy as jnp
from jax.experimental import pallas as pl
from jax.experimental.pallas import tpu as pltpu


def _residual_blend_kernel(x_last_ref, x_prev_ref, o_ref, *, alpha: float):
    # Elementwise VPU hot path, accumulated in f32 (free; kernel is HBM-bound).
    xl = x_last_ref[...].astype(jnp.float32)
    xp = x_prev_ref[...].astype(jnp.float32)
    o_ref[...] = ((1.0 - alpha) * xl + alpha * xp).astype(o_ref.dtype)


# Lane widths tried in order (all multiples of 128 -> unmasked vst).
_LANE_CANDIDATES = (2048, 1024, 512, 256, 128)
# Below this total size a fused XLA elementwise op beats a kernel launch.
_SMALL_BYTES = 2 << 20  # 2 MiB
# Upper bound on a single block buffer; the per-chip VMEM cap below may lower it.
_MAX_BLOCK_BYTES = 8 << 20  # 8 MiB


def _vmem_capacity_bytes() -> int:
    """Physical VMEM per TensorCore; conservative 64 MiB if the query fails."""
    try:
        cap = int(pltpu.get_tpu_info().vmem_capacity_bytes)
        if cap > 0:
            return cap
    except Exception:
        pass
    return 64 << 20


def residual_connection(Xs, alpha: float = 0.5, *, use_pallas=None):
    """Pallas equivalent of ResidualConnection.forward."""
    assert len(Xs) >= 1
    if len(Xs) == 1:
        # Passthrough — no compute, no kernel.
        return Xs[-1]

    x_last, x_prev = Xs[-1], Xs[-2]
    assert x_last.shape == x_prev.shape and x_last.dtype == x_prev.dtype

    orig_shape = x_last.shape
    dtype = x_last.dtype
    itemsize = jnp.dtype(dtype).itemsize
    total = int(x_last.size)
    total_bytes = total * itemsize

    if use_pallas is None:
        use_pallas = total_bytes >= _SMALL_BYTES

    # Pick the widest lane-dense last dimension that divides the flattened size.
    lane = next((l for l in _LANE_CANDIDATES if total % l == 0), None)

    if (not use_pallas) or lane is None:
        # Fast path / fallback: plain fused elementwise blend (XLA fuses this
        # into the producer). Also covers sizes not divisible by 128.
        xl = x_last.astype(jnp.float32)
        xp = x_prev.astype(jnp.float32)
        return ((1.0 - alpha) * xl + alpha * xp).astype(dtype)

    rows = total // lane

    # Sublane packing: 8 rows per vreg for 32-bit, 16 for bf16, 32 for int8.
    row_mult = 8 * max(1, 4 // itemsize)

    # Generation-aware block target: keep 6 live block buffers (2 in + 1 out,
    # double-buffered) under ~half of physical VMEM.
    vmem_cap = _vmem_capacity_bytes()
    target_block_bytes = min(_MAX_BLOCK_BYTES, vmem_cap // 12)

    if rows <= row_mult:
        # Single block covering the full row dim (block == full dim is allowed).
        row_tile = rows
    else:
        row_tile = target_block_bytes // (lane * itemsize)
        row_tile = max(row_mult, (row_tile // row_mult) * row_mult)

        # Force enough grid steps that the pipeline actually overlaps DMA with
        # compute/writeback, and that v7x's two TensorCores both get work.
        target_steps = 4 if total_bytes >= (1 << 20) else 2
        if rows >= target_steps * row_mult:
            step_cap = max(row_mult, (rows // target_steps // row_mult) * row_mult)
            row_tile = min(row_tile, step_cap)

        # Never exceed a whole-row_mult cover of the row dim.
        row_tile = min(row_tile, max(row_mult, (rows // row_mult) * row_mult))

    block_bytes = row_tile * lane * itemsize
    # Explicit scoped-VMEM budget: 6 live buffers + ~25% headroom + slack,
    # clamped well under physical VMEM (safe even on v7x's 64 MiB).
    vmem_limit = int(6 * block_bytes * 1.25) + (2 << 20)
    vmem_limit = max(vmem_limit, 16 << 20)
    vmem_limit = min(vmem_limit, int(vmem_cap * 0.75))

    a2 = x_last.reshape(rows, lane)
    b2 = x_prev.reshape(rows, lane)

    grid = (pl.cdiv(rows, row_tile),)
    spec = pl.BlockSpec((row_tile, lane), lambda i: (i, 0))

    kernel = functools.partial(_residual_blend_kernel, alpha=float(alpha))

    out2 = pl.pallas_call(
        kernel,
        out_shape=jax.ShapeDtypeStruct((rows, lane), dtype),
        grid_spec=pltpu.PrefetchScalarGridSpec(
            num_scalar_prefetch=0,
            grid=grid,
            in_specs=[spec, spec],
            out_specs=spec,
        ),
        compiler_params=pltpu.CompilerParams(
            # Single mem-bound axis: shard across TensorCores on v7x megacore.
            dimension_semantics=("parallel",),
            vmem_limit_bytes=vmem_limit,
        ),
        cost_estimate=pl.CostEstimate(
            flops=3 * total,            # 2 muls + 1 add per element
            transcendentals=0,
            bytes_accessed=3 * total_bytes,
        ),
    )(a2, b2)

    return out2.reshape(orig_shape)


if __name__ == "__main__":
    key = jax.random.PRNGKey(0)
    k1, k2, k3, k4, k5, k6, k7 = jax.random.split(key, 7)
    alpha = 0.5

    # ---- Kernel path on the GAT-node-feature demo shape (64 nodes x 32 hidden) ----
    N, H = 64, 32
    x0 = jax.random.normal(k1, (N, H), dtype=jnp.float32)
    x1 = jax.random.normal(k2, (N, H), dtype=jnp.float32)
    x2 = jax.random.normal(k3, (N, H), dtype=jnp.float32)

    out = jax.block_until_ready(
        residual_connection([x0, x1, x2], alpha=alpha, use_pallas=True))
    ref = (1.0 - alpha) * x2 + alpha * x1
    assert out.shape == ref.shape and out.dtype == ref.dtype
    assert jnp.allclose(out, ref, atol=1e-6, rtol=1e-6)

    # ---- Kernel path with a multi-step grid and a partial trailing block ----
    # (65, 256) -> lane=256, rows=65, row_tile=32, grid=(3,), last block masked.
    y1 = jax.random.normal(k4, (65, 256), dtype=jnp.float32)
    y2 = jax.random.normal(k5, (65, 256), dtype=jnp.float32)
    out_multi = jax.block_until_ready(
        residual_connection([y1, y2], alpha=alpha, use_pallas=True))
    ref_multi = (1.0 - alpha) * y2 + alpha * y1
    assert jnp.allclose(out_multi, ref_multi, atol=1e-6, rtol=1e-6)

    # ---- bf16 kernel path (f32 accumulation inside the kernel) ----
    b1 = x1.astype(jnp.bfloat16)
    b2 = x2.astype(jnp.bfloat16)
    out_bf16 = jax.block_until_ready(
        residual_connection([b1, b2], alpha=alpha, use_pallas=True))
    ref_bf16 = ((1.0 - alpha) * b2.astype(jnp.float32)
                + alpha * b1.astype(jnp.float32)).astype(jnp.bfloat16)
    assert out_bf16.dtype == jnp.bfloat16
    assert jnp.allclose(out_bf16.astype(jnp.float32),
                        ref_bf16.astype(jnp.float32), atol=2e-2, rtol=2e-2)

    # ---- Small-input fast path (auto -> plain jnp, XLA-fusible) ----
    out_fast = jax.block_until_ready(residual_connection([x1, x2], alpha=alpha))
    assert jnp.allclose(out_fast, ref, atol=1e-6, rtol=1e-6)

    # ---- Non-128-divisible total -> jnp fallback ----
    z1 = jax.random.normal(k6, (7, 5), dtype=jnp.float32)
    z2 = jax.random.normal(k7, (7, 5), dtype=jnp.float32)
    out_odd = jax.block_until_ready(residual_connection([z1, z2], alpha=alpha))
    assert jnp.allclose(out_odd, (1.0 - alpha) * z2 + alpha * z1, atol=1e-6, rtol=1e-6)

    # ---- Passthrough path (len(Xs) == 1) ----
    out1 = jax.block_until_ready(residual_connection([x0], alpha=alpha))
    assert jnp.allclose(out1, x0)

    print("KERNEL_OK")
</pallas_src>

<mosaic_0001>
module attributes {stable_mosaic.version = 11 : i64} {
  func.func @_residual_blend_kernel(%arg0: i32, %arg1: memref<1x2048xf32, #tpu.memory_space<vmem>>, %arg2: memref<1x2048xf32, #tpu.memory_space<vmem>>, %arg3: memref<1x2048xf32, #tpu.memory_space<vmem>>) attributes {dimension_semantics = [#tpu.dimension_semantics<parallel>], iteration_bounds = array<i64: 1>, scalar_prefetch = 0 : i64, scratch_operands = 0 : i64, tpu.core_type = #tpu.core_type<tc>, window_params = [{transform_indices = @transform_0, window_bounds = array<i64: 1, 2048>}, {transform_indices = @transform_1, window_bounds = array<i64: 1, 2048>}, {transform_indices = @transform_2, window_bounds = array<i64: 1, 2048>}]} {
    %c0 = arith.constant 0 : index
    %c0_0 = arith.constant 0 : index
    %0 = vector.load %arg1[%c0, %c0_0] : memref<1x2048xf32, #tpu.memory_space<vmem>>, vector<1x2048xf32>
    %c0_1 = arith.constant 0 : index
    %c0_2 = arith.constant 0 : index
    %1 = vector.load %arg2[%c0_1, %c0_2] : memref<1x2048xf32, #tpu.memory_space<vmem>>, vector<1x2048xf32>
    %cst = arith.constant 5.000000e-01 : f32
    %2 = vector.broadcast %cst : f32 to vector<1x2048xf32>
    %3 = arith.mulf %2, %0 : vector<1x2048xf32>
    %cst_3 = arith.constant 5.000000e-01 : f32
    %4 = vector.broadcast %cst_3 : f32 to vector<1x2048xf32>
    %5 = arith.mulf %4, %1 : vector<1x2048xf32>
    %6 = arith.addf %3, %5 : vector<1x2048xf32>
    %c0_4 = arith.constant 0 : index
    %c0_5 = arith.constant 0 : index
    %7 = vector.load %arg3[%c0_4, %c0_5] : memref<1x2048xf32, #tpu.memory_space<vmem>>, vector<1x2048xf32>
    tpu.vector_store %arg3[%c0_4, %c0_5], %6 {strides = array<i32>} : memref<1x2048xf32, #tpu.memory_space<vmem>>, vector<1x2048xf32>,
    return
  }
  func.func @transform_0(%arg0: i32) -> (i32, i32) {
    %c0_i32 = arith.constant 0 : i32
    %c0_i32_0 = arith.constant 0 : i32
    return %arg0, %c0_i32 : i32, i32
  }
  func.func @transform_1(%arg0: i32) -> (i32, i32) {
    %c0_i32 = arith.constant 0 : i32
    %c0_i32_0 = arith.constant 0 : i32
    return %arg0, %c0_i32 : i32, i32
  }
  func.func @transform_2(%arg0: i32) -> (i32, i32) {
    %c0_i32 = arith.constant 0 : i32
    %c0_i32_0 = arith.constant 0 : i32
    return %arg0, %c0_i32 : i32, i32
  }
}

</mosaic_0001>

<llo_original>
// kernel: tpu_custom_call.1
$region0: #{tpu_custom_call.1}
  #allocation0 [shape = 'u32[]', space=smem, size = 0x4, offset = 0x4, fixed_abs, tag = 'smem constant byte address 0x4 - core index']
  #allocation1 [shape = 'u32[72,128]{1,0:T(1,128)}', space=vmem, size = 0x9000, scoped, tag = 'internal scratch']
  %s0 = inlined_call_operand.hbm [shape: f32[1,2048], index: 0, kind: input, shape index: {}]
  %s1 = inlined_call_operand.hbm [shape: f32[1,2048], index: 1, kind: input, shape index: {}]
  %s2 = inlined_call_operand.hbm [shape: f32[1,2048], index: 2, kind: output, shape index: {}]
  %s3 = sld [smem:[#allocation0]]
  $region26: #{tpu_custom_call.1} parent=0
    _
  %s5 = ssub.s32 1, %s3
  %s6 = scalar_select 0, %s5, %s3
  $region1: #{tpu_custom_call.1} parent=0
    #allocation2 [shape = 'u8[8192]{0}', space=vmem, size = 0x2000, scoped, tag = 'input window, operand 0, single buffered']
    #allocation3 [shape = 's32[1]{0}', space=sflag, size = 0x4, scoped, tag = 'scoped memory for tpu_custom_call.1']
    #allocation4 [shape = 's32[1]{0}', space=sflag, size = 0x4, scoped, tag = 'scoped memory for tpu_custom_call.1']
    #allocation5 [shape = 'u8[8192]{0}', space=vmem, size = 0x2000, scoped, tag = 'input window, operand 1, single buffered']
    #allocation6 [shape = 's32[1]{0}', space=sflag, size = 0x4, scoped, tag = 'scoped memory for tpu_custom_call.1']
    #allocation7 [shape = 'u8[8192]{0}', space=vmem, size = 0x2000, scoped, tag = 'output window, operand 0, single buffered']
    %7 = vsyncpa [#allocation3], 0
    %8 = vsyncpa [#allocation6], 0
    %9 = vsyncpa [#allocation4], 0
    // Predicated region
    $region2: #{tpu_custom_call.1} parent=1 // pred_check
      _
    $region3: #{tpu_custom_call.1} parent=1 // pred_check_branch
      %11 = sbr.rel (0) target = $region5
    $region4: #{tpu_custom_call.1} parent=1 // pred_region
      %13 = vsyncadd [#allocation3], 0
      %s15 = sshll.u32 %s0, 4
      %s16 = int_to_ptr.hbm [resolvable:$true] %s15
      %s17 = sshll.u32 [#allocation2], 4
      %s18 = int_to_ptr.vmem [resolvable:$true] %s17
      %20 = dma.hbm_to_vmem [thread:$0]  %s16, 256, %s18, [#allocation3]
    $region5: #{tpu_custom_call.1} parent=1 // pred_fallthru
      _
    // Predicated region
    $region6: #{tpu_custom_call.1} parent=1 // pred_check
      _
    $region7: #{tpu_custom_call.1} parent=1 // pred_check_branch
      %22 = sbr.rel (0) target = $region9
    $region8: #{tpu_custom_call.1} parent=1 // pred_region
      %24 = vsyncadd [#allocation6], 0
      %s26 = sshll.u32 %s1, 4
      %s27 = int_to_ptr.hbm [resolvable:$true] %s26
      %s28 = sshll.u32 [#allocation5], 4
      %s29 = int_to_ptr.vmem [resolvable:$true] %s28
      %31 = dma.hbm_to_vmem [thread:$0]  %s27, 256, %s29, [#allocation6]
    $region9: #{tpu_custom_call.1} parent=1 // pred_fallthru
      _
    // Predicated region
    $region10: #{tpu_custom_call.1} parent=1 // pred_check
      _
    $region11: #{tpu_custom_call.1} parent=1 // pred_check_branch
      %33 = sbr.rel (0) target = $region13
    $region12: #{tpu_custom_call.1} parent=1 // pred_region
      %35 = dma.done [#allocation3], 256
    $region13: #{tpu_custom_call.1} parent=1 // pred_fallthru
      _
    // Predicated region
    $region14: #{tpu_custom_call.1} parent=1 // pred_check
      _
    $region15: #{tpu_custom_call.1} parent=1 // pred_check_branch
      %37 = sbr.rel (0) target = $region17
    $region16: #{tpu_custom_call.1} parent=1 // pred_region
      %39 = dma.done [#allocation6], 256
    $region17: #{tpu_custom_call.1} parent=1 // pred_fallthru
      _
    %v40 = vld [vmem:[#allocation2] sm:$0xff]
    %v41 = vld [vmem:[#allocation2 + $0x8] sm:$0xff]
    %v42 = vld [vmem:[#allocation5] sm:$0xff]
    %v43 = vld [vmem:[#allocation5 + $0x8] sm:$0xff]
    %v44 = vmul.f32 %v40, 0.5
    %v45 = vmul.f32 %v41, 0.5
    %v46 = vmul.f32 %v42, 0.5
    %v47 = vmul.f32 %v43, 0.5
    %v48 = vadd.f32 %v44, %v46
    %v49 = vadd.f32 %v45, %v47
    %50 = vst [vmem:[#allocation7] sm:$0xff] %v48
    %51 = vst [vmem:[#allocation7 + $0x8] sm:$0xff] %v49
    // Predicated region
    $region18: #{tpu_custom_call.1} parent=1 // pred_check
      _
    $region19: #{tpu_custom_call.1} parent=1 // pred_check_branch
      %53 = sbr.rel (0) target = $region21
    $region20: #{tpu_custom_call.1} parent=1 // pred_region
      %55 = vsyncadd [#allocation4], 0
      %s57 = sshll.u32 [#allocation7], 4
      %s58 = int_to_ptr.vmem [resolvable:$true] %s57
      %s59 = sshll.u32 %s2, 4
      %s60 = int_to_ptr.hbm [resolvable:$true] %s59
      %62 = dma.vmem_to_hbm [thread:$0]  %s58, 256, %s60, [#allocation4]
    $region21: #{tpu_custom_call.1} parent=1 // pred_fallthru
      _
    // Predicated region
    $region22: #{tpu_custom_call.1} parent=1 // pred_check
      _
    $region23: #{tpu_custom_call.1} parent=1 // pred_check_branch
      %64 = sbr.rel (0) target = $region25
    $region24: #{tpu_custom_call.1} parent=1 // pred_region
      %66 = dma.done [#allocation4], 256
    $region25: #{tpu_custom_call.1} parent=1 // pred_fallthru
      _
    %67 = vsyncpa [#allocation3], 1
    %68 = vsyncpa [#allocation6], 1
    %69 = vsyncpa [#allocation4], 1

</llo_original>
